<compile_context>
chip_gen: v6e
topology: v6e:2x2x1
jax: 0.10.0
libtpu: 0.0.40
codegen_flags: <defaults>
</compile_context>

<pallas_src>
import functools

import jax
import jax.numpy as jnp
from jax.experimental import pallas as pl
from jax.experimental.pallas import tpu as pltpu


def _round_up(x, m):
    return (x + m - 1) // m * m


def _round_down(x, m):
    return x // m * m


# --------------------------------------------------------------------------
# Kernels
# --------------------------------------------------------------------------
def _linear_whole_kernel(x_ref, w_ref, b_ref, o_ref):
    """Whole problem in a single VMEM-resident block (no grid).

    x: (B, K) f32  (cast to bf16 in-kernel; free VPU work hidden under DMA)
    w: (K, N) bf16 (prepacked transpose, init-time)
    b: (1, N) f32
    o: (B, N) f32
    """
    x = x_ref[...].astype(jnp.bfloat16)
    o_ref[...] = (
        jnp.dot(x, w_ref[...], preferred_element_type=jnp.float32) + b_ref[...]
    )


def _linear_k_resident_kernel(x_ref, w_ref, b_ref, o_ref):
    """One (B, tn) output tile; K collapsed (full-K weight slab per tile).

    x: (B, K) f32  -- constant index_map => fetched once, resident over N tiles
    w: (K, tn) bf16 -- one contiguous prepacked tile streamed from HBM
    b: (1, tn) f32
    o: (B, tn) f32
    """
    x = x_ref[...].astype(jnp.bfloat16)
    o_ref[...] = (
        jnp.dot(x, w_ref[...], preferred_element_type=jnp.float32) + b_ref[...]
    )


def _linear_k_tiled_kernel(tk, x_ref, w_ref, b_ref, o_ref):
    """Huge-K fallback: grid=(n, k); f32 output block resident across k."""
    k = pl.program_id(1)

    @pl.when(k == 0)
    def _():
        o_ref[...] = jnp.broadcast_to(b_ref[...], o_ref.shape)

    start = pl.multiple_of(k * tk, 128)
    x = x_ref[:, pl.ds(start, tk)].astype(jnp.bfloat16)
    o_ref[...] += jnp.dot(x, w_ref[...], preferred_element_type=jnp.float32)


# --------------------------------------------------------------------------
# Builder: one-time weight packing + path selection
# --------------------------------------------------------------------------
def make_classifier_forward(
    weight,
    bias,
    *,
    tn_max=1024,
    tk_max=1024,
    weight_vmem_budget_bytes=24 * 1024 * 1024,
):
    """Build the forward fn; transpose / pad / cast / tile-pack weights ONCE.

    Path selection:
      1. single block  -- whole (K, N) bf16 weight comfortably fits VMEM:
         no grid, no padding, no output slice, no wrapper cast.  This is the
         path the nominal Classifier shape takes.
      2. N-tiled, K collapsed -- weight repacked tile-contiguously as
         (n_tiles, K, tn); grid=(n_tiles,); activations resident; pure
         weight-streaming pipeline.
      3. N + K tiled -- only if a double-buffered (K, tn) slab can't fit the
         budget even at tn=128; bias folded at k == 0, resident accumulator,
         Buffered(3) weight stream.
    The 24 MiB weight budget keeps every plan inside v7x's 32 MiB scoped VMEM
    default (v5e/v6e: 128 MiB physical).
    """
    N, K = weight.shape
    assert bias.shape == (N,)

    # Defensive: caps must be lane-aligned multiples of 128.
    tn_max = max(128, _round_down(int(tn_max), 128))
    tk_max = max(128, _round_down(int(tk_max), 128))

    # ---- one-time packing (init-time, NOT on the per-call path) -----------
    w_t = jnp.asarray(weight).T.astype(jnp.bfloat16)   # (K, N)
    b_f32 = jnp.asarray(bias, dtype=jnp.float32)

    np128 = _round_up(N, 128)

    if N <= tn_max and K * np128 * 2 <= weight_vmem_budget_bytes // 2:
        # ---- path 1: everything in one VMEM-resident block ----------------
        w_packed = w_t                     # (K, N) bf16, unpadded
        b_packed = b_f32.reshape(1, N)

        @jax.jit
        def _forward(x, w_p, b_p):
            B = x.shape[0]
            vmem = pl.BlockSpec(memory_space=pltpu.MemorySpace.VMEM)
            return pl.pallas_call(
                _linear_whole_kernel,
                out_shape=jax.ShapeDtypeStruct((B, N), jnp.float32),
                in_specs=[vmem, vmem, vmem],
                out_specs=vmem,
            )(x, w_p, b_p)

    else:
        # Largest lane-aligned tn whose double-buffered (K, tn) bf16 slab
        # fits the weight budget.
        tn_fit = _round_down(weight_vmem_budget_bytes // (2 * K * 2), 128)

        if tn_fit >= 128:
            # ---- path 2: N-tiled, K collapsed ------------------------------
            tn = min(tn_max, np128, tn_fit)
            Np = _round_up(N, tn)
            n_tiles = Np // tn

            w_pad = jnp.zeros((K, Np), jnp.bfloat16).at[:, :N].set(w_t)
            # Tile-contiguous layout: each (K, tn) tile is one contiguous
            # HBM read instead of K strided rows.
            w_packed = w_pad.reshape(K, n_tiles, tn).transpose(1, 0, 2)
            b_packed = jnp.zeros((1, Np), jnp.float32).at[0, :N].set(b_f32)

            # N tiles are independent.  (On v7x with many tiles,
            # pltpu.CORE_PARALLEL here would shard them across the two
            # TensorCores; kept as plain "parallel" for v5e/v6e portability.)
            sem = ("parallel",) if n_tiles > 1 else ("arbitrary",)

            @jax.jit
            def _forward(x, w_p, b_p):
                B = x.shape[0]
                out = pl.pallas_call(
                    _linear_k_resident_kernel,
                    out_shape=jax.ShapeDtypeStruct((B, Np), jnp.float32),
                    grid_spec=pltpu.PrefetchScalarGridSpec(
                        num_scalar_prefetch=0,
                        grid=(n_tiles,),
                        in_specs=[
                            # activations: constant index_map => DMA'd once,
                            # resident across all N tiles.
                            pl.BlockSpec((B, K), lambda n: (0, 0)),
                            # weight: one contiguous (K, tn) tile per step.
                            pl.BlockSpec((None, K, tn), lambda n: (n, 0, 0)),
                            pl.BlockSpec((1, tn), lambda n: (0, n)),
                        ],
                        out_specs=pl.BlockSpec((B, tn), lambda n: (0, n)),
                    ),
                    compiler_params=pltpu.CompilerParams(
                        dimension_semantics=sem,
                    ),
                )(x, w_p, b_p)
                return out if Np == N else out[:, :N]

        else:
            # ---- path 3: N + K tiled (huge-K fallback) ---------------------
            tn = min(512, np128)
            Np = _round_up(N, tn)
            n_tiles = Np // tn
            tk = min(tk_max, _round_up(K, 128))
            Kp = _round_up(K, tk)
            k_tiles = Kp // tk

            w_pad = jnp.zeros((Kp, Np), jnp.bfloat16).at[:K, :N].set(w_t)
            # Tile-contiguous layout: (n_tiles, k_tiles, tk, tn).
            w_packed = w_pad.reshape(k_tiles, tk, n_tiles, tn).transpose(
                2, 0, 1, 3
            )
            b_packed = jnp.zeros((1, Np), jnp.float32).at[0, :N].set(b_f32)

            kernel = functools.partial(_linear_k_tiled_kernel, tk)

            @jax.jit
            def _forward(x, w_p, b_p):
                B = x.shape[0]
                if x.shape[1] != Kp:   # negligible next to the weight stream
                    x = jnp.pad(x, ((0, 0), (0, Kp - x.shape[1])))
                out = pl.pallas_call(
                    kernel,
                    out_shape=jax.ShapeDtypeStruct((B, Np), jnp.float32),
                    grid_spec=pltpu.PrefetchScalarGridSpec(
                        num_scalar_prefetch=0,
                        grid=(n_tiles, k_tiles),
                        in_specs=[
                            # activations resident across the whole grid.
                            pl.BlockSpec((B, Kp), lambda n, k: (0, 0)),
                            # deep-buffered contiguous weight tile stream.
                            pl.BlockSpec(
                                (None, None, tk, tn),
                                lambda n, k: (n, k, 0, 0),
                                pipeline_mode=pl.Buffered(3),
                            ),
                            pl.BlockSpec((1, tn), lambda n, k: (0, n)),
                        ],
                        out_specs=pl.BlockSpec((B, tn), lambda n, k: (0, n)),
                    ),
                    compiler_params=pltpu.CompilerParams(
                        # K is the reduction axis: it must stay LAST and
                        # "arbitrary" for the resident-output + k==0
                        # bias-init pattern to be correct.
                        dimension_semantics=("parallel", "arbitrary"),
                    ),
                )(x, w_p, b_p)
                return out if Np == N else out[:, :N]

    def forward(x):
        return _forward(x, w_packed, b_packed)

    return forward


# --------------------------------------------------------------------------
# Demo / self-test
# --------------------------------------------------------------------------
if __name__ == "__main__":
    key = jax.random.PRNGKey(0)

    def make_params(k, feat_in, num_classes):
        k_x, k_w, k_b = jax.random.split(k, 3)
        x = jax.random.normal(k_x, (8, feat_in), dtype=jnp.float32)
        # kaiming_normal_ (fan_in, gain=sqrt(2)) on (num_classes, feat_in).
        std = (2.0 / feat_in) ** 0.5
        w = std * jax.random.normal(k_w, (num_classes, feat_in), dtype=jnp.float32)
        # nn.Linear default bias init: U(-1/sqrt(fan_in), 1/sqrt(fan_in)).
        bound = 1.0 / (feat_in ** 0.5)
        b = jax.random.uniform(
            k_b, (num_classes,), minval=-bound, maxval=bound, dtype=jnp.float32
        )
        return x, w, b

    k1, k2 = jax.random.split(key)

    # 1) Nominal Classifier shape (scaled): single-block path, one pallas_call,
    #    no padding / slicing / wrapper casts.
    x, weight, bias = make_params(k1, feat_in=256, num_classes=100)
    y = jax.block_until_ready(make_classifier_forward(weight, bias)(x))
    y_ref = x @ weight.T + bias
    assert y.shape == (8, 100)
    assert jnp.allclose(y, y_ref, atol=5e-2, rtol=5e-2)

    # 2) Force the N-tiled, K-collapsed weight-streaming path (tn_max=128 =>
    #    3 contiguous weight tiles, activations resident across the grid).
    x2, weight2, bias2 = make_params(k2, feat_in=512, num_classes=384)
    fwd2 = make_classifier_forward(weight2, bias2, tn_max=128)
    y2 = jax.block_until_ready(fwd2(x2))
    y2_ref = x2 @ weight2.T + bias2
    assert y2.shape == (8, 384)
    assert jnp.allclose(y2, y2_ref, atol=5e-2, rtol=5e-2)

    print("KERNEL_OK")
</pallas_src>

<mosaic_0001>
module attributes {stable_mosaic.version = 11 : i64} {
  func.func @_linear_whole_kernel(%arg0: memref<8x256xf32, #tpu.memory_space<vmem>>, %arg1: memref<256x100xbf16, #tpu.memory_space<vmem>>, %arg2: memref<1x100xf32, #tpu.memory_space<vmem>>, %arg3: memref<8x100xf32, #tpu.memory_space<vmem>>) attributes {dimension_semantics = [], scalar_prefetch = 0 : i64, scratch_operands = 0 : i64, tpu.core_type = #tpu.core_type<tc>} {
    %c0 = arith.constant 0 : index
    %c0_0 = arith.constant 0 : index
    %0 = vector.load %arg0[%c0, %c0_0] : memref<8x256xf32, #tpu.memory_space<vmem>>, vector<8x256xf32>
    %1 = arith.truncf %0 : vector<8x256xf32> to vector<8x256xbf16>
    %c0_1 = arith.constant 0 : index
    %c0_2 = arith.constant 0 : index
    %2 = vector.load %arg1[%c0_1, %c0_2] : memref<256x100xbf16, #tpu.memory_space<vmem>>, vector<256x100xbf16>
    %cst = arith.constant dense<0.000000e+00> : vector<8x100xf32>
    %3 = tpu.matmul %1, %2, %cst {dimension_numbers = #tpu.dot_dimension_numbers<[1], [0], [0], [1], [0, 0, 1, 1], [], []>} : vector<8x256xbf16>, vector<256x100xbf16>, vector<8x100xf32> -> vector<8x100xf32>
    %c0_3 = arith.constant 0 : index
    %c0_4 = arith.constant 0 : index
    %4 = vector.load %arg2[%c0_3, %c0_4] : memref<1x100xf32, #tpu.memory_space<vmem>>, vector<1x100xf32>
    %5 = vector.broadcast %4 : vector<1x100xf32> to vector<8x100xf32>
    %6 = arith.addf %3, %5 : vector<8x100xf32>
    %c0_5 = arith.constant 0 : index
    %c0_6 = arith.constant 0 : index
    %7 = vector.load %arg3[%c0_5, %c0_6] : memref<8x100xf32, #tpu.memory_space<vmem>>, vector<8x100xf32>
    tpu.vector_store %arg3[%c0_5, %c0_6], %6 {strides = array<i32>} : memref<8x100xf32, #tpu.memory_space<vmem>>, vector<8x100xf32>,
    return
  }
}

</mosaic_0001>

<llo_original>
// kernel: _forward.1
$region0: #{_forward.1}
  #allocation0 [shape = 'u32[]', space=smem, size = 0x4, offset = 0x4, fixed_abs, tag = 'smem constant byte address 0x4 - core index']
  #allocation1 [shape = 'u32[144,128]{1,0:T(1,128)}', space=vmem, size = 0x12000, scoped, tag = 'internal scratch']
  %s0 = inlined_call_operand.vmem [shape: f32[8,256], index: 0, kind: input, shape index: {}]
  %s1 = inlined_call_operand.vmem [shape: bf16[256,100], index: 1, kind: input, shape index: {}]
  %s2 = inlined_call_operand.vmem [shape: f32[1,100], index: 2, kind: input, shape index: {}]
  %s3 = inlined_call_operand.hbm [shape: f32[8,100], index: 3, kind: output, shape index: {}]
  %s4 = sld [smem:[#allocation0]]
  $region22: #{_forward.1} parent=0
    _
  %s6 = ssub.s32 1, %s4
  %s7 = scalar_select 0, %s6, %s4
  $region1: #{_forward.1} parent=0
    #allocation2 [shape = 'u8[4096]{0}', space=vmem, size = 0x1000, scoped, tag = 'output window, operand 0, single buffered']
    #allocation3 [shape = 's32[1]{0}', space=sflag, size = 0x4, scoped, tag = 'scoped memory for _forward.1']
    %8 = vsyncpa [#allocation3], 0
    // Predicated region
    $region2: #{_forward.1} parent=1 // pred_check
      _
    $region3: #{_forward.1} parent=1 // pred_check_branch
      %10 = sbr.rel (0) target = $region5
    $region4: #{_forward.1} parent=1 // pred_region
      _
    $region5: #{_forward.1} parent=1 // pred_fallthru
      _
    // Predicated region
    $region6: #{_forward.1} parent=1 // pred_check
      _
    $region7: #{_forward.1} parent=1 // pred_check_branch
      %12 = sbr.rel (0) target = $region9
    $region8: #{_forward.1} parent=1 // pred_region
      _
    $region9: #{_forward.1} parent=1 // pred_fallthru
      _
    // Predicated region
    $region10: #{_forward.1} parent=1 // pred_check
      _
    $region11: #{_forward.1} parent=1 // pred_check_branch
      %14 = sbr.rel (0) target = $region13
    $region12: #{_forward.1} parent=1 // pred_region
      _
    $region13: #{_forward.1} parent=1 // pred_fallthru
      _
    %v16 = vld [vmem:[%s0] sm:$0xff]
    %v17 = vld [vmem:[%s0 + $0x8] sm:$0xff]
    %v18 = vpack.c.bf16 %v16, %v16
    %v19 = vpack.c.bf16 %v17, %v17
    %v20 = vld [vmem:[%s1] sm:$0xf]
    %v21 = vld [vmem:[%s1 + $0x4] sm:$0xf]
    %v22 = vld [vmem:[%s1 + $0x8] sm:$0xf]
    %v23 = vld [vmem:[%s1 + $0xc] sm:$0xf]
    %v24 = vld [vmem:[%s1 + $0x10] sm:$0xf]
    %v25 = vld [vmem:[%s1 + $0x14] sm:$0xf]
    %v26 = vld [vmem:[%s1 + $0x18] sm:$0xf]
    %v27 = vld [vmem:[%s1 + $0x1c] sm:$0xf]
    %v28 = vld [vmem:[%s1 + $0x20] sm:$0xf]
    %v29 = vld [vmem:[%s1 + $0x24] sm:$0xf]
    %v30 = vld [vmem:[%s1 + $0x28] sm:$0xf]
    %v31 = vld [vmem:[%s1 + $0x2c] sm:$0xf]
    %v32 = vld [vmem:[%s1 + $0x30] sm:$0xf]
    %v33 = vld [vmem:[%s1 + $0x34] sm:$0xf]
    %v34 = vld [vmem:[%s1 + $0x38] sm:$0xf]
    %v35 = vld [vmem:[%s1 + $0x3c] sm:$0xf]
    %v36 = vld [vmem:[%s1 + $0x40] sm:$0xf]
    %v37 = vld [vmem:[%s1 + $0x44] sm:$0xf]
    %v38 = vld [vmem:[%s1 + $0x48] sm:$0xf]
    %v39 = vld [vmem:[%s1 + $0x4c] sm:$0xf]
    %v40 = vld [vmem:[%s1 + $0x50] sm:$0xf]
    %v41 = vld [vmem:[%s1 + $0x54] sm:$0xf]
    %v42 = vld [vmem:[%s1 + $0x58] sm:$0xf]
    %v43 = vld [vmem:[%s1 + $0x5c] sm:$0xf]
    %v44 = vld [vmem:[%s1 + $0x60] sm:$0xf]
    %v45 = vld [vmem:[%s1 + $0x64] sm:$0xf]
    %v46 = vld [vmem:[%s1 + $0x68] sm:$0xf]
    %v47 = vld [vmem:[%s1 + $0x6c] sm:$0xf]
    %v48 = vld [vmem:[%s1 + $0x70] sm:$0xf]
    %v49 = vld [vmem:[%s1 + $0x74] sm:$0xf]
    %v50 = vld [vmem:[%s1 + $0x78] sm:$0xf]
    %v51 = vld [vmem:[%s1 + $0x7c] sm:$0xf]
    %v52 = vld [vmem:[%s2] sm:$0x1]
    %v54 = vlaneseq
    %v55 = vshrl.u32 %v54, 7
    %v56 = vsub.s32 0, %v55
    %v57 = vrot.slane %v52, %v56
    %v91 = vunpack.c.l.b16 %v20
    %v92 = vunpack.c.l.b16 %v21
    %v93 = vunpack.c.l.b16 %v22
    %v94 = vunpack.c.l.b16 %v23
    %v95 = vunpack.c.l.b16 %v24
    %v96 = vunpack.c.l.b16 %v25
    %v97 = vunpack.c.l.b16 %v26
    %v98 = vunpack.c.l.b16 %v27
    %v99 = vunpack.c.l.b16 %v28
    %v100 = vunpack.c.l.b16 %v29
    %v101 = vunpack.c.l.b16 %v30
    %v102 = vunpack.c.l.b16 %v31
    %v103 = vunpack.c.l.b16 %v32
    %v104 = vunpack.c.l.b16 %v33
    %v105 = vunpack.c.l.b16 %v34
    %v106 = vunpack.c.l.b16 %v35
    %v107 = vunpack.c.l.b16 %v36
    %v108 = vunpack.c.l.b16 %v37
    %v109 = vunpack.c.l.b16 %v38
    %v110 = vunpack.c.l.b16 %v39
    %v111 = vunpack.c.l.b16 %v40
    %v112 = vunpack.c.l.b16 %v41
    %v113 = vunpack.c.l.b16 %v42
    %v114 = vunpack.c.l.b16 %v43
    %v115 = vunpack.c.l.b16 %v44
    %v116 = vunpack.c.l.b16 %v45
    %v117 = vunpack.c.l.b16 %v46
    %v118 = vunpack.c.l.b16 %v47
    %v119 = vunpack.c.l.b16 %v48
    %v120 = vunpack.c.l.b16 %v49
    %v121 = vunpack.c.l.b16 %v50
    %v122 = vunpack.c.l.b16 %v51
    %v123 = vpack.c.b16 %v92, %v91
    %v124 = vpack.c.b16 %v94, %v93
    %v125 = vpack.c.b16 %v96, %v95
    %v126 = vpack.c.b16 %v98, %v97
    %v127 = vpack.c.b16 %v100, %v99
    %v128 = vpack.c.b16 %v102, %v101
    %v129 = vpack.c.b16 %v104, %v103
    %v130 = vpack.c.b16 %v106, %v105
    %v131 = vpack.c.b16 %v108, %v107
    %v132 = vpack.c.b16 %v110, %v109
    %v133 = vpack.c.b16 %v112, %v111
    %v134 = vpack.c.b16 %v114, %v113
    %v135 = vpack.c.b16 %v116, %v115
    %v136 = vpack.c.b16 %v118, %v117
    %v137 = vpack.c.b16 %v120, %v119
    %v138 = vpack.c.b16 %v122, %v121
    %155 = vmatprep.subr.bf16.mxu0 0
    %156 = vmatpush1.bf16.msra.mxu0 %v130
    %157 = vmatprep.subr.bf16.mxu0 0
    %158 = vmatpush1.bf16.msra.mxu0 %v129
    %159 = vmatprep.subr.bf16.mxu0 0
    %160 = vmatpush1.bf16.msra.mxu0 %v128
    %161 = vmatprep.subr.bf16.mxu0 0
    %162 = vmatpush1.bf16.msra.mxu0 %v127
    %163 = vmatprep.subr.bf16.mxu0 0
    %164 = vmatpush1.bf16.msra.mxu0 %v126
    %165 = vmatprep.subr.bf16.mxu0 0
    %166 = vmatpush1.bf16.msra.mxu0 %v125
    %167 = vmatprep.subr.bf16.mxu0 0
    %168 = vmatpush1.bf16.msra.mxu0 %v124
    %169 = vmatprep.subr.bf16.mxu0 0
    %170 = vmatpush1.bf16.msra.mxu0 %v123
    %171 = vmatprep.subr.bf16.mxu0 0
    %172 = vmatpush2.bf16.msra.mxu0 %v138
    %173 = vmatprep.subr.bf16.mxu0 0
    %174 = vmatpush2.bf16.msra.mxu0 %v137
    %175 = vmatprep.subr.bf16.mxu0 0
    %176 = vmatpush2.bf16.msra.mxu0 %v136
    %177 = vmatprep.subr.bf16.mxu0 0
    %178 = vmatpush2.bf16.msra.mxu0 %v135
    %179 = vmatprep.subr.bf16.mxu0 0
    %180 = vmatpush2.bf16.msra.mxu0 %v134
    %181 = vmatprep.subr.bf16.mxu0 0
    %182 = vmatpush2.bf16.msra.mxu0 %v133
    %183 = vmatprep.subr.bf16.mxu0 0
    %184 = vmatpush2.bf16.msra.mxu0 %v132
    %185 = vmatprep.subr.bf16.mxu0 0
    %186 = vmatpush2.bf16.msra.mxu0 %v131
    %187 = vmatprep.mubr.bf16.mxu0 %v19
    %188 = vmatmul.mubr.bf16.gmra.mxu0 %v18
    %v189 = vpop.f32.mrf.mxu0
    %v190 = vadd.f32 %v57, %v189
    %v191 = vpop.f32.mrf.mxu0
    %v192 = vpop.f32.mrf.mxu0
    %v193 = vpop.f32.mrf.mxu0
    %194 = vdwg.mxu0
    %vm195 = vcmask 818176
    %196 = vst.msk [vmem:[#allocation2] sm:$0xff] %vm195, %v190
    // Predicated region
    $region14: #{_forward.1} parent=1 // pred_check
      _
    $region15: #{_forward.1} parent=1 // pred_check_branch
      %198 = sbr.rel (0) target = $region17
    $region16: #{_forward.1} parent=1 // pred_region
      %s200 = ssub.s32 128, 128
      %201 = vsyncadd [#allocation3], %s200
      %s203 = sshll.u32 [#allocation2], 4
      %s204 = int_to_ptr.vmem [resolvable:$true] %s203
      %206 = dma.vmem_to_hbm [thread:$0]  %s204, 128, %s3, [#allocation3]
    $region17: #{_forward.1} parent=1 // pred_fallthru
      _
    // Predicated region
    $region18: #{_forward.1} parent=1 // pred_check
      _
    $region19: #{_forward.1} parent=1 // pred_check_branch
      %208 = sbr.rel (0) target = $region21
    $region20: #{_forward.1} parent=1 // pred_region
      %209 = dma.done [#allocation3], 128
    $region21: #{_forward.1} parent=1 // pred_fallthru
      _
    %210 = vsyncpa [#allocation3], 1

</llo_original>
